<compile_context>
chip_gen: v5e
topology: v5e:2x2
jax: 0.10.0
libtpu: 0.0.40
codegen_flags: <defaults>
</compile_context>

<pallas_src>
import jax
import jax.numpy as jnp
from jax.experimental import pallas as pl
from jax.experimental.pallas import tpu as pltpu


def _round_up(n, m):
    return ((n + m - 1) // m) * m


def rnn_fwd_kernel(x_ref, wih0_ref, b0_ref, whh0_ref, wih1_ref, b1_ref,
                   whh1_ref, wl_ref, bl_ref, out_ref):
    # x_ref   : (T, Bb, Ip) bf16, time-major, zero-padded
    # wih0    : (Ip, Hp) bf16 ; b0 : (1, Hp) f32 (= b_ih0 + b_hh0)
    # whh0/wih1/whh1 : (Hp, Hp) bf16 ; b1 : (1, Hp) f32 (= b_ih1 + b_hh1)
    # wl      : (Hp, Cp) bf16 ; bl : (1, Cp) f32
    # out_ref : (Bb, Cp) f32
    T, Bb, Ip = x_ref.shape
    Hp = whh0_ref.shape[0]
    bf16 = jnp.bfloat16

    # ---- prologue: layer-0 input projection for ALL time steps, one MXU matmul --
    # (T, Bb, Ip) -> (T*Bb, Ip) merges leading dims only (layout-free).
    x_flat = x_ref[...].reshape(T * Bb, Ip)
    proj0 = (jnp.dot(x_flat, wih0_ref[...], preferred_element_type=jnp.float32)
             + b0_ref[...])                                      # (T*Bb, Hp) f32

    # Loop-invariant weights (bf16 halves their vreg/VMEM footprint).  The
    # recurrent RHS (whh0/whh1) is loop-invariant; we rely on Mosaic keeping it
    # MXU-stationary across the unrolled steps (explicit matmul_push_rhs /
    # matmul_acc_lhs / matmul_pop is a follow-up if the bundle dump shows
    # per-step re-pushes).
    whh0 = whh0_ref[...]
    wih1 = wih1_ref[...]
    whh1 = whh1_ref[...]
    b1 = jnp.broadcast_to(b1_ref[...], (Bb, Hp))   # hoist broadcast out of the loop

    h0 = jnp.zeros((Bb, Hp), jnp.float32)
    h1 = jnp.zeros((Bb, Hp), jnp.float32)
    # T is small & static -> full unroll for scheduler visibility.  The layer-1
    # update for step t is independent of the layer-0 update for step t+1, so the
    # critical path is ~T dependent matmul+tanh steps, not 2T.  For large T,
    # switch these scans to lax.fori_loop(..., unroll=k) to bound code size.
    for t in range(T):
        h0 = jnp.tanh(
            proj0[t * Bb:(t + 1) * Bb, :]          # static, (8,128)-aligned slice
            + jnp.dot(h0.astype(bf16), whh0, preferred_element_type=jnp.float32))
        h1 = jnp.tanh(
            jnp.dot(h0.astype(bf16), wih1, preferred_element_type=jnp.float32)
            + b1
            + jnp.dot(h1.astype(bf16), whh1, preferred_element_type=jnp.float32))

    # ---- final linear (lane-dense (Bb, Cp) output, unmasked stores) -------------
    out_ref[...] = (jnp.dot(h1.astype(bf16), wl_ref[...],
                            preferred_element_type=jnp.float32) + bl_ref[...])


def prepare_params(params):
    """One-time weight preparation: transpose, zero-pad to lane-dense shapes,
    fold biases, cast matmul operands to bf16.  Do this ONCE and reuse the result
    across forward calls (per review: keeps the per-call wrapper to x prep only)."""
    H, I = params["w_ih0"].shape
    C = params["w_lin"].shape[0]
    Ip = _round_up(I, 128)
    # NOTE: for production H > 128 on v6e/v7x, padding Hp to a multiple of 256
    # better fills the 256x256 MXU; 128 is already optimal on v5e and for H<=128.
    Hp = _round_up(H, 128)
    Cp = _round_up(C, 128)

    f32, bf16 = jnp.float32, jnp.bfloat16

    def pad_t(w, rows, cols):            # transpose, zero-pad, cast to bf16
        w = w.T.astype(f32)
        return jnp.pad(w, ((0, rows - w.shape[0]), (0, cols - w.shape[1]))).astype(bf16)

    def pad_b(b, cols):                  # bias row, keep f32 (VPU/EUP math stays f32)
        b = b.astype(f32).reshape(1, -1)
        return jnp.pad(b, ((0, 0), (0, cols - b.shape[1])))

    prepped = {
        "wih0": pad_t(params["w_ih0"], Ip, Hp),
        "b0":   pad_b(params["b_ih0"] + params["b_hh0"], Hp),
        "whh0": pad_t(params["w_hh0"], Hp, Hp),
        "wih1": pad_t(params["w_ih1"], Hp, Hp),
        "b1":   pad_b(params["b_ih1"] + params["b_hh1"], Hp),
        "whh1": pad_t(params["w_hh1"], Hp, Hp),
        "wl":   pad_t(params["w_lin"], Hp, Cp),
        "bl":   pad_b(params["b_lin"], Cp),
    }
    meta = {"I": I, "H": H, "C": C, "Ip": Ip, "Hp": Hp, "Cp": Cp}
    return prepped, meta


def rnn_forward(x, prepped, meta):
    """x: (B, T, I) float32 (batch_first).  Returns (B, num_classes) float32."""
    B, T, I = x.shape
    assert I == meta["I"]
    Ip, Hp, Cp, C = meta["Ip"], meta["Hp"], meta["Cp"], meta["C"]

    # Batch blocking: 16-row multiple (bf16 sublane packing), <=256 rows per block
    # so the grid can shard over both v7x TensorCores for realistic batches and the
    # per-block VMEM residency stays small (<< v7x's 64 MiB).
    Bb = min(_round_up(B, 16), 256)
    n_b = pl.cdiv(_round_up(B, 16), Bb)
    Bp = n_b * Bb

    # Per-call wrapper work: time-major, pad, cast to bf16 (reads T*B*I, no proj0
    # materialization in HBM).
    x_tm = jnp.transpose(x, (1, 0, 2)).astype(jnp.float32)         # (T, B, I)
    x_tm = jnp.pad(x_tm, ((0, 0), (0, Bp - B), (0, Ip - I))).astype(jnp.bfloat16)

    w_spec = lambda shape: pl.BlockSpec(shape, lambda i: (0, 0))    # same block each step
    out_padded = pl.pallas_call(
        rnn_fwd_kernel,
        out_shape=jax.ShapeDtypeStruct((Bp, Cp), jnp.float32),
        grid=(n_b,),
        in_specs=[
            pl.BlockSpec((T, Bb, Ip), lambda i: (0, i, 0)),         # batch block of x
            w_spec((Ip, Hp)), w_spec((1, Hp)), w_spec((Hp, Hp)),
            w_spec((Hp, Hp)), w_spec((1, Hp)), w_spec((Hp, Hp)),
            w_spec((Hp, Cp)), w_spec((1, Cp)),
        ],
        out_specs=pl.BlockSpec((Bb, Cp), lambda i: (i, 0)),
        compiler_params=pltpu.CompilerParams(
            dimension_semantics=("parallel",),                      # megacore / 2 TCs
            # Re-derive for large shapes per generation (v7x: 64 MiB physical VMEM);
            # at these sizes resident bytes are << 1 MiB.
            vmem_limit_bytes=32 * 1024 * 1024),
    )(x_tm, prepped["wih0"], prepped["b0"], prepped["whh0"],
      prepped["wih1"], prepped["b1"], prepped["whh1"],
      prepped["wl"], prepped["bl"])

    return out_padded[:B, :C]


def init_params(key, inp_size, hidden_size, num_classes):
    """Deterministic synthetic init (PyTorch-style uniform(-1/sqrt(H), 1/sqrt(H)))."""
    ks = jax.random.split(key, 10)
    bound = 1.0 / jnp.sqrt(hidden_size)

    def u(k, shape):
        return jax.random.uniform(k, shape, jnp.float32, -bound, bound)

    return {
        "w_ih0": u(ks[0], (hidden_size, inp_size)),
        "w_hh0": u(ks[1], (hidden_size, hidden_size)),
        "b_ih0": u(ks[2], (hidden_size,)),
        "b_hh0": u(ks[3], (hidden_size,)),
        "w_ih1": u(ks[4], (hidden_size, hidden_size)),
        "w_hh1": u(ks[5], (hidden_size, hidden_size)),
        "b_ih1": u(ks[6], (hidden_size,)),
        "b_hh1": u(ks[7], (hidden_size,)),
        "w_lin": u(ks[8], (num_classes, hidden_size)),
        "b_lin": u(ks[9], (num_classes,)),
    }


def rnn_forward_reference(x, params, matmul_dtype=jnp.float32):
    """Pure-JAX reference.  matmul_dtype=bfloat16 emulates the kernel's MXU
    operand precision (f32 accumulation) for a tight check."""
    B, T, I = x.shape
    H = params["w_hh0"].shape[0]

    def mm(a, b):
        return jnp.dot(a.astype(matmul_dtype), b.astype(matmul_dtype),
                       preferred_element_type=jnp.float32)

    h0 = jnp.zeros((B, H), jnp.float32)
    h1 = jnp.zeros((B, H), jnp.float32)
    for t in range(T):
        x_t = x[:, t, :].astype(jnp.float32)
        h0 = jnp.tanh(mm(x_t, params["w_ih0"].T) + params["b_ih0"]
                      + mm(h0, params["w_hh0"].T) + params["b_hh0"])
        h1 = jnp.tanh(mm(h0, params["w_ih1"].T) + params["b_ih1"]
                      + mm(h1, params["w_hh1"].T) + params["b_hh1"])
    return mm(h1, params["w_lin"].T) + params["b_lin"]


if __name__ == "__main__":
    # Small shapes consistent with the module's forward: (batch, seq, input_size).
    B, T, I = 2, 8, 16
    H, C = 32, 10

    key = jax.random.PRNGKey(0)
    k_x, k_p = jax.random.split(key)
    x = jax.random.normal(k_x, (B, T, I), dtype=jnp.float32)
    params = init_params(k_p, I, H, C)

    prepped, meta = prepare_params(params)          # one-time weight prep
    fwd = jax.jit(lambda xx, pp: rnn_forward(xx, pp, meta))

    out = jax.block_until_ready(fwd(x, prepped))
    assert out.shape == (B, C)

    # Tight check vs. a reference emulating the kernel's bf16 MXU operands.
    ref_bf16 = rnn_forward_reference(x, params, matmul_dtype=jnp.bfloat16)
    assert jnp.allclose(out, ref_bf16, atol=5e-3, rtol=5e-3), \
        float(jnp.max(jnp.abs(out - ref_bf16)))
    # Looser semantic check vs. a full-f32 reference (bf16 operand rounding,
    # tanh-saturated -> small, bounded deviation).
    ref_f32 = rnn_forward_reference(x, params, matmul_dtype=jnp.float32)
    assert jnp.allclose(out, ref_f32, atol=5e-2, rtol=5e-2), \
        float(jnp.max(jnp.abs(out - ref_f32)))

    print("KERNEL_OK")
</pallas_src>

<mosaic_0001>
module attributes {stable_mosaic.version = 11 : i64} {
  func.func @rnn_fwd_kernel(%arg0: i32, %arg1: memref<8x16x128xbf16, #tpu.memory_space<vmem>>, %arg2: memref<128x128xbf16, #tpu.memory_space<vmem>>, %arg3: memref<1x128xf32, #tpu.memory_space<vmem>>, %arg4: memref<128x128xbf16, #tpu.memory_space<vmem>>, %arg5: memref<128x128xbf16, #tpu.memory_space<vmem>>, %arg6: memref<1x128xf32, #tpu.memory_space<vmem>>, %arg7: memref<128x128xbf16, #tpu.memory_space<vmem>>, %arg8: memref<128x128xbf16, #tpu.memory_space<vmem>>, %arg9: memref<1x128xf32, #tpu.memory_space<vmem>>, %arg10: memref<16x128xf32, #tpu.memory_space<vmem>>) attributes {dimension_semantics = [#tpu.dimension_semantics<parallel>], iteration_bounds = array<i64: 1>, scalar_prefetch = 0 : i64, scratch_operands = 0 : i64, tpu.core_type = #tpu.core_type<tc>, window_params = [{transform_indices = @transform_0, window_bounds = array<i64: 8, 16, 128>}, {pipeline_mode = #tpu.pipeline_mode<synchronous>, transform_indices = @transform_1, window_bounds = array<i64: 128, 128>}, {pipeline_mode = #tpu.pipeline_mode<synchronous>, transform_indices = @transform_2, window_bounds = array<i64: 1, 128>}, {pipeline_mode = #tpu.pipeline_mode<synchronous>, transform_indices = @transform_3, window_bounds = array<i64: 128, 128>}, {pipeline_mode = #tpu.pipeline_mode<synchronous>, transform_indices = @transform_4, window_bounds = array<i64: 128, 128>}, {pipeline_mode = #tpu.pipeline_mode<synchronous>, transform_indices = @transform_5, window_bounds = array<i64: 1, 128>}, {pipeline_mode = #tpu.pipeline_mode<synchronous>, transform_indices = @transform_6, window_bounds = array<i64: 128, 128>}, {pipeline_mode = #tpu.pipeline_mode<synchronous>, transform_indices = @transform_7, window_bounds = array<i64: 128, 128>}, {pipeline_mode = #tpu.pipeline_mode<synchronous>, transform_indices = @transform_8, window_bounds = array<i64: 1, 128>}, {transform_indices = @transform_9, window_bounds = array<i64: 16, 128>}]} {
    %c0 = arith.constant 0 : index
    %c0_0 = arith.constant 0 : index
    %c0_1 = arith.constant 0 : index
    %0 = vector.load %arg1[%c0, %c0_0, %c0_1] : memref<8x16x128xbf16, #tpu.memory_space<vmem>>, vector<8x16x128xbf16>
    %1 = vector.shape_cast %0 : vector<8x16x128xbf16> to vector<128x128xbf16>
    %c0_2 = arith.constant 0 : index
    %c0_3 = arith.constant 0 : index
    %2 = vector.load %arg2[%c0_2, %c0_3] : memref<128x128xbf16, #tpu.memory_space<vmem>>, vector<128x128xbf16>
    %cst = arith.constant dense<0.000000e+00> : vector<128x128xf32>
    %3 = tpu.matmul %1, %2, %cst {dimension_numbers = #tpu.dot_dimension_numbers<[1], [0], [0], [1], [0, 0, 1, 1], [], []>} : vector<128x128xbf16>, vector<128x128xbf16>, vector<128x128xf32> -> vector<128x128xf32>
    %c0_4 = arith.constant 0 : index
    %c0_5 = arith.constant 0 : index
    %4 = vector.load %arg3[%c0_4, %c0_5] : memref<1x128xf32, #tpu.memory_space<vmem>>, vector<1x128xf32>
    %5 = vector.broadcast %4 : vector<1x128xf32> to vector<128x128xf32>
    %6 = arith.addf %3, %5 : vector<128x128xf32>
    %c0_6 = arith.constant 0 : index
    %c0_7 = arith.constant 0 : index
    %7 = vector.load %arg4[%c0_6, %c0_7] : memref<128x128xbf16, #tpu.memory_space<vmem>>, vector<128x128xbf16>
    %c0_8 = arith.constant 0 : index
    %c0_9 = arith.constant 0 : index
    %8 = vector.load %arg5[%c0_8, %c0_9] : memref<128x128xbf16, #tpu.memory_space<vmem>>, vector<128x128xbf16>
    %c0_10 = arith.constant 0 : index
    %c0_11 = arith.constant 0 : index
    %9 = vector.load %arg7[%c0_10, %c0_11] : memref<128x128xbf16, #tpu.memory_space<vmem>>, vector<128x128xbf16>
    %c0_12 = arith.constant 0 : index
    %c0_13 = arith.constant 0 : index
    %10 = vector.load %arg6[%c0_12, %c0_13] : memref<1x128xf32, #tpu.memory_space<vmem>>, vector<1x128xf32>
    %11 = vector.shape_cast %10 : vector<1x128xf32> to vector<1x128xf32>
    %12 = vector.broadcast %11 : vector<1x128xf32> to vector<16x128xf32>
    %cst_14 = arith.constant 0.000000e+00 : f32
    %13 = vector.broadcast %cst_14 : f32 to vector<16x128xf32>
    %cst_15 = arith.constant 0.000000e+00 : f32
    %14 = vector.broadcast %cst_15 : f32 to vector<16x128xf32>
    %15 = vector.extract_strided_slice %6 {offsets = [0, 0], sizes = [16, 128], strides = [1, 1]} : vector<128x128xf32> to vector<16x128xf32>
    %16 = arith.truncf %13 : vector<16x128xf32> to vector<16x128xbf16>
    %cst_16 = arith.constant dense<0.000000e+00> : vector<16x128xf32>
    %17 = tpu.matmul %16, %7, %cst_16 {dimension_numbers = #tpu.dot_dimension_numbers<[1], [0], [0], [1], [0, 0, 1, 1], [], []>} : vector<16x128xbf16>, vector<128x128xbf16>, vector<16x128xf32> -> vector<16x128xf32>
    %18 = arith.addf %15, %17 : vector<16x128xf32>
    %19 = math.tanh %18 : vector<16x128xf32>
    %20 = arith.truncf %19 : vector<16x128xf32> to vector<16x128xbf16>
    %cst_17 = arith.constant dense<0.000000e+00> : vector<16x128xf32>
    %21 = tpu.matmul %20, %8, %cst_17 {dimension_numbers = #tpu.dot_dimension_numbers<[1], [0], [0], [1], [0, 0, 1, 1], [], []>} : vector<16x128xbf16>, vector<128x128xbf16>, vector<16x128xf32> -> vector<16x128xf32>
    %22 = arith.addf %21, %12 : vector<16x128xf32>
    %23 = arith.truncf %14 : vector<16x128xf32> to vector<16x128xbf16>
    %cst_18 = arith.constant dense<0.000000e+00> : vector<16x128xf32>
    %24 = tpu.matmul %23, %9, %cst_18 {dimension_numbers = #tpu.dot_dimension_numbers<[1], [0], [0], [1], [0, 0, 1, 1], [], []>} : vector<16x128xbf16>, vector<128x128xbf16>, vector<16x128xf32> -> vector<16x128xf32>
    %25 = arith.addf %22, %24 : vector<16x128xf32>
    %26 = math.tanh %25 : vector<16x128xf32>
    %27 = vector.extract_strided_slice %6 {offsets = [16, 0], sizes = [16, 128], strides = [1, 1]} : vector<128x128xf32> to vector<16x128xf32>
    %28 = arith.truncf %19 : vector<16x128xf32> to vector<16x128xbf16>
    %cst_19 = arith.constant dense<0.000000e+00> : vector<16x128xf32>
    %29 = tpu.matmul %28, %7, %cst_19 {dimension_numbers = #tpu.dot_dimension_numbers<[1], [0], [0], [1], [0, 0, 1, 1], [], []>} : vector<16x128xbf16>, vector<128x128xbf16>, vector<16x128xf32> -> vector<16x128xf32>
    %30 = arith.addf %27, %29 : vector<16x128xf32>
    %31 = math.tanh %30 : vector<16x128xf32>
    %32 = arith.truncf %31 : vector<16x128xf32> to vector<16x128xbf16>
    %cst_20 = arith.constant dense<0.000000e+00> : vector<16x128xf32>
    %33 = tpu.matmul %32, %8, %cst_20 {dimension_numbers = #tpu.dot_dimension_numbers<[1], [0], [0], [1], [0, 0, 1, 1], [], []>} : vector<16x128xbf16>, vector<128x128xbf16>, vector<16x128xf32> -> vector<16x128xf32>
    %34 = arith.addf %33, %12 : vector<16x128xf32>
    %35 = arith.truncf %26 : vector<16x128xf32> to vector<16x128xbf16>
    %cst_21 = arith.constant dense<0.000000e+00> : vector<16x128xf32>
    %36 = tpu.matmul %35, %9, %cst_21 {dimension_numbers = #tpu.dot_dimension_numbers<[1], [0], [0], [1], [0, 0, 1, 1], [], []>} : vector<16x128xbf16>, vector<128x128xbf16>, vector<16x128xf32> -> vector<16x128xf32>
    %37 = arith.addf %34, %36 : vector<16x128xf32>
    %38 = math.tanh %37 : vector<16x128xf32>
    %39 = vector.extract_strided_slice %6 {offsets = [32, 0], sizes = [16, 128], strides = [1, 1]} : vector<128x128xf32> to vector<16x128xf32>
    %40 = arith.truncf %31 : vector<16x128xf32> to vector<16x128xbf16>
    %cst_22 = arith.constant dense<0.000000e+00> : vector<16x128xf32>
    %41 = tpu.matmul %40, %7, %cst_22 {dimension_numbers = #tpu.dot_dimension_numbers<[1], [0], [0], [1], [0, 0, 1, 1], [], []>} : vector<16x128xbf16>, vector<128x128xbf16>, vector<16x128xf32> -> vector<16x128xf32>
    %42 = arith.addf %39, %41 : vector<16x128xf32>
    %43 = math.tanh %42 : vector<16x128xf32>
    %44 = arith.truncf %43 : vector<16x128xf32> to vector<16x128xbf16>
    %cst_23 = arith.constant dense<0.000000e+00> : vector<16x128xf32>
    %45 = tpu.matmul %44, %8, %cst_23 {dimension_numbers = #tpu.dot_dimension_numbers<[1], [0], [0], [1], [0, 0, 1, 1], [], []>} : vector<16x128xbf16>, vector<128x128xbf16>, vector<16x128xf32> -> vector<16x128xf32>
    %46 = arith.addf %45, %12 : vector<16x128xf32>
    %47 = arith.truncf %38 : vector<16x128xf32> to vector<16x128xbf16>
    %cst_24 = arith.constant dense<0.000000e+00> : vector<16x128xf32>
    %48 = tpu.matmul %47, %9, %cst_24 {dimension_numbers = #tpu.dot_dimension_numbers<[1], [0], [0], [1], [0, 0, 1, 1], [], []>} : vector<16x128xbf16>, vector<128x128xbf16>, vector<16x128xf32> -> vector<16x128xf32>
    %49 = arith.addf %46, %48 : vector<16x128xf32>
    %50 = math.tanh %49 : vector<16x128xf32>
    %51 = vector.extract_strided_slice %6 {offsets = [48, 0], sizes = [16, 128], strides = [1, 1]} : vector<128x128xf32> to vector<16x128xf32>
    %52 = arith.truncf %43 : vector<16x128xf32> to vector<16x128xbf16>
    %cst_25 = arith.constant dense<0.000000e+00> : vector<16x128xf32>
    %53 = tpu.matmul %52, %7, %cst_25 {dimension_numbers = #tpu.dot_dimension_numbers<[1], [0], [0], [1], [0, 0, 1, 1], [], []>} : vector<16x128xbf16>, vector<128x128xbf16>, vector<16x128xf32> -> vector<16x128xf32>
    %54 = arith.addf %51, %53 : vector<16x128xf32>
    %55 = math.tanh %54 : vector<16x128xf32>
    %56 = arith.truncf %55 : vector<16x128xf32> to vector<16x128xbf16>
    %cst_26 = arith.constant dense<0.000000e+00> : vector<16x128xf32>
    %57 = tpu.matmul %56, %8, %cst_26 {dimension_numbers = #tpu.dot_dimension_numbers<[1], [0], [0], [1], [0, 0, 1, 1], [], []>} : vector<16x128xbf16>, vector<128x128xbf16>, vector<16x128xf32> -> vector<16x128xf32>
    %58 = arith.addf %57, %12 : vector<16x128xf32>
    %59 = arith.truncf %50 : vector<16x128xf32> to vector<16x128xbf16>
    %cst_27 = arith.constant dense<0.000000e+00> : vector<16x128xf32>
    %60 = tpu.matmul %59, %9, %cst_27 {dimension_numbers = #tpu.dot_dimension_numbers<[1], [0], [0], [1], [0, 0, 1, 1], [], []>} : vector<16x128xbf16>, vector<128x128xbf16>, vector<16x128xf32> -> vector<16x128xf32>
    %61 = arith.addf %58, %60 : vector<16x128xf32>
    %62 = math.tanh %61 : vector<16x128xf32>
    %63 = vector.extract_strided_slice %6 {offsets = [64, 0], sizes = [16, 128], strides = [1, 1]} : vector<128x128xf32> to vector<16x128xf32>
    %64 = arith.truncf %55 : vector<16x128xf32> to vector<16x128xbf16>
    %cst_28 = arith.constant dense<0.000000e+00> : vector<16x128xf32>
    %65 = tpu.matmul %64, %7, %cst_28 {dimension_numbers = #tpu.dot_dimension_numbers<[1], [0], [0], [1], [0, 0, 1, 1], [], []>} : vector<16x128xbf16>, vector<128x128xbf16>, vector<16x128xf32> -> vector<16x128xf32>
    %66 = arith.addf %63, %65 : vector<16x128xf32>
    %67 = math.tanh %66 : vector<16x128xf32>
    %68 = arith.truncf %67 : vector<16x128xf32> to vector<16x128xbf16>
    %cst_29 = arith.constant dense<0.000000e+00> : vector<16x128xf32>
    %69 = tpu.matmul %68, %8, %cst_29 {dimension_numbers = #tpu.dot_dimension_numbers<[1], [0], [0], [1], [0, 0, 1, 1], [], []>} : vector<16x128xbf16>, vector<128x128xbf16>, vector<16x128xf32> -> vector<16x128xf32>
    %70 = arith.addf %69, %12 : vector<16x128xf32>
    %71 = arith.truncf %62 : vector<16x128xf32> to vector<16x128xbf16>
    %cst_30 = arith.constant dense<0.000000e+00> : vector<16x128xf32>
    %72 = tpu.matmul %71, %9, %cst_30 {dimension_numbers = #tpu.dot_dimension_numbers<[1], [0], [0], [1], [0, 0, 1, 1], [], []>} : vector<16x128xbf16>, vector<128x128xbf16>, vector<16x128xf32> -> vector<16x128xf32>
    %73 = arith.addf %70, %72 : vector<16x128xf32>
    %74 = math.tanh %73 : vector<16x128xf32>
    %75 = vector.extract_strided_slice %6 {offsets = [80, 0], sizes = [16, 128], strides = [1, 1]} : vector<128x128xf32> to vector<16x128xf32>
    %76 = arith.truncf %67 : vector<16x128xf32> to vector<16x128xbf16>
    %cst_31 = arith.constant dense<0.000000e+00> : vector<16x128xf32>
    %77 = tpu.matmul %76, %7, %cst_31 {dimension_numbers = #tpu.dot_dimension_numbers<[1], [0], [0], [1], [0, 0, 1, 1], [], []>} : vector<16x128xbf16>, vector<128x128xbf16>, vector<16x128xf32> -> vector<16x128xf32>
    %78 = arith.addf %75, %77 : vector<16x128xf32>
    %79 = math.tanh %78 : vector<16x128xf32>
    %80 = arith.truncf %79 : vector<16x128xf32> to vector<16x128xbf16>
    %cst_32 = arith.constant dense<0.000000e+00> : vector<16x128xf32>
    %81 = tpu.matmul %80, %8, %cst_32 {dimension_numbers = #tpu.dot_dimension_numbers<[1], [0], [0], [1], [0, 0, 1, 1], [], []>} : vector<16x128xbf16>, vector<128x128xbf16>, vector<16x128xf32> -> vector<16x128xf32>
    %82 = arith.addf %81, %12 : vector<16x128xf32>
    %83 = arith.truncf %74 : vector<16x128xf32> to vector<16x128xbf16>
    %cst_33 = arith.constant dense<0.000000e+00> : vector<16x128xf32>
    %84 = tpu.matmul %83, %9, %cst_33 {dimension_numbers = #tpu.dot_dimension_numbers<[1], [0], [0], [1], [0, 0, 1, 1], [], []>} : vector<16x128xbf16>, vector<128x128xbf16>, vector<16x128xf32> -> vector<16x128xf32>
    %85 = arith.addf %82, %84 : vector<16x128xf32>
    %86 = math.tanh %85 : vector<16x128xf32>
    %87 = vector.extract_strided_slice %6 {offsets = [96, 0], sizes = [16, 128], strides = [1, 1]} : vector<128x128xf32> to vector<16x128xf32>
    %88 = arith.truncf %79 : vector<16x128xf32> to vector<16x128xbf16>
    %cst_34 = arith.constant dense<0.000000e+00> : vector<16x128xf32>
    %89 = tpu.matmul %88, %7, %cst_34 {dimension_numbers = #tpu.dot_dimension_numbers<[1], [0], [0], [1], [0, 0, 1, 1], [], []>} : vector<16x128xbf16>, vector<128x128xbf16>, vector<16x128xf32> -> vector<16x128xf32>
    %90 = arith.addf %87, %89 : vector<16x128xf32>
    %91 = math.tanh %90 : vector<16x128xf32>
    %92 = arith.truncf %91 : vector<16x128xf32> to vector<16x128xbf16>
    %cst_35 = arith.constant dense<0.000000e+00> : vector<16x128xf32>
    %93 = tpu.matmul %92, %8, %cst_35 {dimension_numbers = #tpu.dot_dimension_numbers<[1], [0], [0], [1], [0, 0, 1, 1], [], []>} : vector<16x128xbf16>, vector<128x128xbf16>, vector<16x128xf32> -> vector<16x128xf32>
    %94 = arith.addf %93, %12 : vector<16x128xf32>
    %95 = arith.truncf %86 : vector<16x128xf32> to vector<16x128xbf16>
    %cst_36 = arith.constant dense<0.000000e+00> : vector<16x128xf32>
    %96 = tpu.matmul %95, %9, %cst_36 {dimension_numbers = #tpu.dot_dimension_numbers<[1], [0], [0], [1], [0, 0, 1, 1], [], []>} : vector<16x128xbf16>, vector<128x128xbf16>, vector<16x128xf32> -> vector<16x128xf32>
    %97 = arith.addf %94, %96 : vector<16x128xf32>
    %98 = math.tanh %97 : vector<16x128xf32>
    %99 = vector.extract_strided_slice %6 {offsets = [112, 0], sizes = [16, 128], strides = [1, 1]} : vector<128x128xf32> to vector<16x128xf32>
    %100 = arith.truncf %91 : vector<16x128xf32> to vector<16x128xbf16>
    %cst_37 = arith.constant dense<0.000000e+00> : vector<16x128xf32>
    %101 = tpu.matmul %100, %7, %cst_37 {dimension_numbers = #tpu.dot_dimension_numbers<[1], [0], [0], [1], [0, 0, 1, 1], [], []>} : vector<16x128xbf16>, vector<128x128xbf16>, vector<16x128xf32> -> vector<16x128xf32>
    %102 = arith.addf %99, %101 : vector<16x128xf32>
    %103 = math.tanh %102 : vector<16x128xf32>
    %104 = arith.truncf %103 : vector<16x128xf32> to vector<16x128xbf16>
    %cst_38 = arith.constant dense<0.000000e+00> : vector<16x128xf32>
    %105 = tpu.matmul %104, %8, %cst_38 {dimension_numbers = #tpu.dot_dimension_numbers<[1], [0], [0], [1], [0, 0, 1, 1], [], []>} : vector<16x128xbf16>, vector<128x128xbf16>, vector<16x128xf32> -> vector<16x128xf32>
    %106 = arith.addf %105, %12 : vector<16x128xf32>
    %107 = arith.truncf %98 : vector<16x128xf32> to vector<16x128xbf16>
    %cst_39 = arith.constant dense<0.000000e+00> : vector<16x128xf32>
    %108 = tpu.matmul %107, %9, %cst_39 {dimension_numbers = #tpu.dot_dimension_numbers<[1], [0], [0], [1], [0, 0, 1, 1], [], []>} : vector<16x128xbf16>, vector<128x128xbf16>, vector<16x128xf32> -> vector<16x128xf32>
    %109 = arith.addf %106, %108 : vector<16x128xf32>
    %110 = math.tanh %109 : vector<16x128xf32>
    %111 = arith.truncf %110 : vector<16x128xf32> to vector<16x128xbf16>
    %c0_40 = arith.constant 0 : index
    %c0_41 = arith.constant 0 : index
    %112 = vector.load %arg8[%c0_40, %c0_41] : memref<128x128xbf16, #tpu.memory_space<vmem>>, vector<128x128xbf16>
    %cst_42 = arith.constant dense<0.000000e+00> : vector<16x128xf32>
    %113 = tpu.matmul %111, %112, %cst_42 {dimension_numbers = #tpu.dot_dimension_numbers<[1], [0], [0], [1], [0, 0, 1, 1], [], []>} : vector<16x128xbf16>, vector<128x128xbf16>, vector<16x128xf32> -> vector<16x128xf32>
    %c0_43 = arith.constant 0 : index
    %c0_44 = arith.constant 0 : index
    %114 = vector.load %arg9[%c0_43, %c0_44] : memref<1x128xf32, #tpu.memory_space<vmem>>, vector<1x128xf32>
    %115 = vector.broadcast %114 : vector<1x128xf32> to vector<16x128xf32>
    %116 = arith.addf %113, %115 : vector<16x128xf32>
    %c0_45 = arith.constant 0 : index
    %c0_46 = arith.constant 0 : index
    %117 = vector.load %arg10[%c0_45, %c0_46] : memref<16x128xf32, #tpu.memory_space<vmem>>, vector<16x128xf32>
    tpu.vector_store %arg10[%c0_45, %c0_46], %116 {strides = array<i32>} : memref<16x128xf32, #tpu.memory_space<vmem>>, vector<16x128xf32>,
    return
  }
  func.func @transform_0(%arg0: i32) -> (i32, i32, i32) {
    %c0_i32 = arith.constant 0 : i32
    %c0_i32_0 = arith.constant 0 : i32
    %c0_i32_1 = arith.constant 0 : i32
    return %c0_i32, %arg0, %c0_i32_0 : i32, i32, i32
  }
  func.func @transform_1(%arg0: i32) -> (i32, i32) {
    %c0_i32 = arith.constant 0 : i32
    %c0_i32_0 = arith.constant 0 : i32
    %c0_i32_1 = arith.constant 0 : i32
    return %c0_i32, %c0_i32_0 : i32, i32
  }
  func.func @transform_2(%arg0: i32) -> (i32, i32) {
    %c0_i32 = arith.constant 0 : i32
    %c0_i32_0 = arith.constant 0 : i32
    %c0_i32_1 = arith.constant 0 : i32
    return %c0_i32, %c0_i32_0 : i32, i32
  }
  func.func @transform_3(%arg0: i32) -> (i32, i32) {
    %c0_i32 = arith.constant 0 : i32
    %c0_i32_0 = arith.constant 0 : i32
    %c0_i32_1 = arith.constant 0 : i32
    return %c0_i32, %c0_i32_0 : i32, i32
  }
  func.func @transform_4(%arg0: i32) -> (i32, i32) {
    %c0_i32 = arith.constant 0 : i32
    %c0_i32_0 = arith.constant 0 : i32
    %c0_i32_1 = arith.constant 0 : i32
    return %c0_i32, %c0_i32_0 : i32, i32
  }
  func.func @transform_5(%arg0: i32) -> (i32, i32) {
    %c0_i32 = arith.constant 0 : i32
    %c0_i32_0 = arith.constant 0 : i32
    %c0_i32_1 = arith.constant 0 : i32
    return %c0_i32, %c0_i32_0 : i32, i32
  }
  func.func @transform_6(%arg0: i32) -> (i32, i32) {
    %c0_i32 = arith.constant 0 : i32
    %c0_i32_0 = arith.constant 0 : i32
    %c0_i32_1 = arith.constant 0 : i32
    return %c0_i32, %c0_i32_0 : i32, i32
  }
  func.func @transform_7(%arg0: i32) -> (i32, i32) {
    %c0_i32 = arith.constant 0 : i32
    %c0_i32_0 = arith.constant 0 : i32
    %c0_i32_1 = arith.constant 0 : i32
    return %c0_i32, %c0_i32_0 : i32, i32
  }
  func.func @transform_8(%arg0: i32) -> (i32, i32) {
    %c0_i32 = arith.constant 0 : i32
    %c0_i32_0 = arith.constant 0 : i32
    %c0_i32_1 = arith.constant 0 : i32
    return %c0_i32, %c0_i32_0 : i32, i32
  }
  func.func @transform_9(%arg0: i32) -> (i32, i32) {
    %c0_i32 = arith.constant 0 : i32
    %c0_i32_0 = arith.constant 0 : i32
    return %arg0, %c0_i32 : i32, i32
  }
}

</mosaic_0001>

<llo_original>
// kernel: _lambda_.1
$region0: #{_lambda_.1}
  #allocation0 [shape = 'u32[]', space=smem, size = 0x4, offset = 0x4, fixed_abs, tag = 'smem constant byte address 0x4 - core index']
  #allocation1 [shape = 'u32[72,128]{1,0:T(1,128)}', space=vmem, size = 0x9000, scoped, tag = 'internal scratch']
  %s0 = inlined_call_operand.vmem [shape: bf16[8,16,128], index: 0, kind: input, shape index: {}]
  %s1 = inlined_call_operand.vmem [shape: bf16[128,128], index: 1, kind: input, shape index: {}]
  %s2 = inlined_call_operand.vmem [shape: f32[1,128], index: 2, kind: input, shape index: {}]
  %s3 = inlined_call_operand.hbm [shape: bf16[128,128], index: 3, kind: input, shape index: {}]
  %s4 = inlined_call_operand.hbm [shape: bf16[128,128], index: 4, kind: input, shape index: {}]
  %s5 = inlined_call_operand.vmem [shape: f32[1,128], index: 5, kind: input, shape index: {}]
  %s6 = inlined_call_operand.hbm [shape: bf16[128,128], index: 6, kind: input, shape index: {}]
  %s7 = inlined_call_operand.hbm [shape: bf16[128,128], index: 7, kind: input, shape index: {}]
  %s8 = inlined_call_operand.vmem [shape: f32[1,128], index: 8, kind: input, shape index: {}]
  %s9 = inlined_call_operand.vmem [shape: f32[16,128], index: 9, kind: output, shape index: {}]
  %s10 = sld [smem:[#allocation0]]
  $region62: #{_lambda_.1} parent=0
    _
  %s12 = ssub.s32 1, %s10
  %s13 = scalar_select 0, %s12, %s10
  $region1: #{_lambda_.1} parent=0
    #allocation2 [shape = 'u8[32768]{0}', space=vmem, size = 0x8000, scoped, tag = 'input window, operand 3, single buffered']
    #allocation3 [shape = 's32[1]{0}', space=sflag, size = 0x4, scoped, tag = 'scoped memory for _lambda_.1']
    #allocation4 [shape = 'u8[32768]{0}', space=vmem, size = 0x8000, scoped, tag = 'input window, operand 4, single buffered']
    #allocation5 [shape = 's32[1]{0}', space=sflag, size = 0x4, scoped, tag = 'scoped memory for _lambda_.1']
    #allocation6 [shape = 'u8[32768]{0}', space=vmem, size = 0x8000, scoped, tag = 'input window, operand 6, single buffered']
    #allocation7 [shape = 'u8[32768]{0}', space=vmem, size = 0x8000, scoped, tag = 'input window, operand 7, single buffered']
    #allocation8 [shape = 's32[1]{0}', space=sflag, size = 0x4, scoped, tag = 'scoped memory for _lambda_.1']
    %14 = vsyncpa [#allocation3], 0
    %15 = vsyncpa [#allocation5], 0
    %16 = vsyncpa [#allocation8], 0
    // Predicated region
    $region2: #{_lambda_.1} parent=1 // pred_check
      _
    $region3: #{_lambda_.1} parent=1 // pred_check_branch
      %18 = sbr.rel (0) target = $region5
    $region4: #{_lambda_.1} parent=1 // pred_region
      _
    $region5: #{_lambda_.1} parent=1 // pred_fallthru
      _
    // Predicated region
    $region6: #{_lambda_.1} parent=1 // pred_check
      _
    $region7: #{_lambda_.1} parent=1 // pred_check_branch
      %20 = sbr.rel (0) target = $region9
    $region8: #{_lambda_.1} parent=1 // pred_region
      _
    $region9: #{_lambda_.1} parent=1 // pred_fallthru
      _
    // Predicated region
    $region10: #{_lambda_.1} parent=1 // pred_check
      _
    $region11: #{_lambda_.1} parent=1 // pred_check_branch
      %22 = sbr.rel (0) target = $region13
    $region12: #{_lambda_.1} parent=1 // pred_region
      _
    $region13: #{_lambda_.1} parent=1 // pred_fallthru
      _
    // Predicated region
    $region14: #{_lambda_.1} parent=1 // pred_check
      _
    $region15: #{_lambda_.1} parent=1 // pred_check_branch
      %24 = sbr.rel (0) target = $region17
    $region16: #{_lambda_.1} parent=1 // pred_region
      %26 = vsyncadd [#allocation3], 0
      %s27 = sshll.u32 %s3, 4
      %s28 = int_to_ptr.hbm [resolvable:$true] %s27
      %s29 = sshll.u32 [#allocation2], 4
      %s30 = int_to_ptr.vmem [resolvable:$true] %s29
      %35 = dma.hbm_to_vmem [thread:$0]  %s28, 1024, %s30, [#allocation3], 64, 64, 4
    $region17: #{_lambda_.1} parent=1 // pred_fallthru
      _
    // Predicated region
    $region18: #{_lambda_.1} parent=1 // pred_check
      _
    $region19: #{_lambda_.1} parent=1 // pred_check_branch
      %37 = sbr.rel (0) target = $region21
    $region20: #{_lambda_.1} parent=1 // pred_region
      %39 = vsyncadd [#allocation5], 0
      %s40 = sshll.u32 %s4, 4
      %s41 = int_to_ptr.hbm [resolvable:$true] %s40
      %s42 = sshll.u32 [#allocation4], 4
      %s43 = int_to_ptr.vmem [resolvable:$true] %s42
      %48 = dma.hbm_to_vmem [thread:$0]  %s41, 1024, %s43, [#allocation5], 64, 64, 4
    $region21: #{_lambda_.1} parent=1 // pred_fallthru
      _
    // Predicated region
    $region22: #{_lambda_.1} parent=1 // pred_check
      _
    $region23: #{_lambda_.1} parent=1 // pred_check_branch
      %50 = sbr.rel (0) target = $region25
    $region24: #{_lambda_.1} parent=1 // pred_region
      _
    $region25: #{_lambda_.1} parent=1 // pred_fallthru
      _
    // Predicated region
    $region26: #{_lambda_.1} parent=1 // pred_check
      _
    $region27: #{_lambda_.1} parent=1 // pred_check_branch
      %52 = sbr.rel (0) target = $region29
    $region28: #{_lambda_.1} parent=1 // pred_region
      %54 = vsyncadd [#allocation5], 0
      %s55 = sshll.u32 %s6, 4
      %s56 = int_to_ptr.hbm [resolvable:$true] %s55
      %s57 = sshll.u32 [#allocation6], 4
      %s58 = int_to_ptr.vmem [resolvable:$true] %s57
      %63 = dma.hbm_to_vmem [thread:$0]  %s56, 1024, %s58, [#allocation5], 64, 64, 4
    $region29: #{_lambda_.1} parent=1 // pred_fallthru
      _
    // Predicated region
    $region30: #{_lambda_.1} parent=1 // pred_check
      _
    $region31: #{_lambda_.1} parent=1 // pred_check_branch
      %65 = sbr.rel (0) target = $region33
    $region32: #{_lambda_.1} parent=1 // pred_region
      %67 = vsyncadd [#allocation8], 0
      %s68 = sshll.u32 %s7, 4
      %s69 = int_to_ptr.hbm [resolvable:$true] %s68
      %s70 = sshll.u32 [#allocation7], 4
      %s71 = int_to_ptr.vmem [resolvable:$true] %s70
      %76 = dma.hbm_to_vmem [thread:$0]  %s69, 1024, %s71, [#allocation8], 64, 64, 4
    $region33: #{_lambda_.1} parent=1 // pred_fallthru
      _
    // Predicated region
    $region34: #{_lambda_.1} parent=1 // pred_check
      _
    $region35: #{_lambda_.1} parent=1 // pred_check_branch
      %78 = sbr.rel (0) target = $region37
    $region36: #{_lambda_.1} parent=1 // pred_region
      _
    $region37: #{_lambda_.1} parent=1 // pred_fallthru
      _
    // Predicated region
    $region38: #{_lambda_.1} parent=1 // pred_check
      _
    $region39: #{_lambda_.1} parent=1 // pred_check_branch
      %80 = sbr.rel (0) target = $region41
    $region40: #{_lambda_.1} parent=1 // pred_region
      %82 = dma.done [#allocation3], 1024
    $region41: #{_lambda_.1} parent=1 // pred_fallthru
      _
    // Predicated region
    $region42: #{_lambda_.1} parent=1 // pred_check
      _
    $region43: #{_lambda_.1} parent=1 // pred_check_branch
      %84 = sbr.rel (0) target = $region45
    $region44: #{_lambda_.1} parent=1 // pred_region
      %86 = dma.done [#allocation5], 1024
    $region45: #{_lambda_.1} parent=1 // pred_fallthru
      _
    // Predicated region
    $region46: #{_lambda_.1} parent=1 // pred_check
      _
    $region47: #{_lambda_.1} parent=1 // pred_check_branch
      %88 = sbr.rel (0) target = $region49
    $region48: #{_lambda_.1} parent=1 // pred_region
      %90 = dma.done [#allocation5], 1024
    $region49: #{_lambda_.1} parent=1 // pred_fallthru
      _
    // Predicated region
    $region50: #{_lambda_.1} parent=1 // pred_check
      _
    $region51: #{_lambda_.1} parent=1 // pred_check_branch
      %92 = sbr.rel (0) target = $region53
    $region52: #{_lambda_.1} parent=1 // pred_region
      %94 = dma.done [#allocation8], 1024
    $region53: #{_lambda_.1} parent=1 // pred_fallthru
      _
    %v96 = vld [vmem:[%s0] sm:$0xf]
    %v97 = vld [vmem:[%s0 + $0x4] sm:$0xf]
    %v98 = vld [vmem:[%s0 + $0x8] sm:$0xf]
    %v99 = vld [vmem:[%s0 + $0xc] sm:$0xf]
    %v100 = vld [vmem:[%s0 + $0x10] sm:$0xf]
    %v101 = vld [vmem:[%s0 + $0x14] sm:$0xf]
    %v102 = vld [vmem:[%s0 + $0x18] sm:$0xf]
    %v103 = vld [vmem:[%s0 + $0x1c] sm:$0xf]
    %v104 = vld [vmem:[%s0 + $0x20] sm:$0xf]
    %v105 = vld [vmem:[%s0 + $0x24] sm:$0xf]
    %v106 = vld [vmem:[%s0 + $0x28] sm:$0xf]
    %v107 = vld [vmem:[%s0 + $0x2c] sm:$0xf]
    %v108 = vld [vmem:[%s0 + $0x30] sm:$0xf]
    %v109 = vld [vmem:[%s0 + $0x34] sm:$0xf]
    %v110 = vld [vmem:[%s0 + $0x38] sm:$0xf]
    %v111 = vld [vmem:[%s0 + $0x3c] sm:$0xf]
    %v112 = vld [vmem:[%s1] sm:$0xf]
    %v113 = vld [vmem:[%s1 + $0x4] sm:$0xf]
    %v114 = vld [vmem:[%s1 + $0x8] sm:$0xf]
    %v115 = vld [vmem:[%s1 + $0xc] sm:$0xf]
    %v116 = vld [vmem:[%s1 + $0x10] sm:$0xf]
    %v117 = vld [vmem:[%s1 + $0x14] sm:$0xf]
    %v118 = vld [vmem:[%s1 + $0x18] sm:$0xf]
    %v119 = vld [vmem:[%s1 + $0x1c] sm:$0xf]
    %v120 = vld [vmem:[%s1 + $0x20] sm:$0xf]
    %v121 = vld [vmem:[%s1 + $0x24] sm:$0xf]
    %v122 = vld [vmem:[%s1 + $0x28] sm:$0xf]
    %v123 = vld [vmem:[%s1 + $0x2c] sm:$0xf]
    %v124 = vld [vmem:[%s1 + $0x30] sm:$0xf]
    %v125 = vld [vmem:[%s1 + $0x34] sm:$0xf]
    %v126 = vld [vmem:[%s1 + $0x38] sm:$0xf]
    %v127 = vld [vmem:[%s1 + $0x3c] sm:$0xf]
    %v128 = vld [vmem:[%s2] sm:$0x1]
    %v130 = vperm.slane %v128, 0
    %v148 = vunpack.c.l.b16 %v96
    %v149 = vunpack.c.l.b16 %v97
    %v150 = vunpack.c.l.b16 %v98
    %v151 = vunpack.c.l.b16 %v99
    %v152 = vunpack.c.l.b16 %v100
    %v153 = vunpack.c.l.b16 %v101
    %v154 = vunpack.c.l.b16 %v102
    %v155 = vunpack.c.l.b16 %v103
    %v156 = vunpack.c.l.b16 %v104
    %v157 = vunpack.c.l.b16 %v105
    %v158 = vunpack.c.l.b16 %v106
    %v159 = vunpack.c.l.b16 %v107
    %v160 = vunpack.c.l.b16 %v108
    %v161 = vunpack.c.l.b16 %v109
    %v162 = vunpack.c.l.b16 %v110
    %v163 = vunpack.c.l.b16 %v111
    %v164 = vpack.c.b16 %v149, %v148
    %v165 = vpack.c.b16 %v151, %v150
    %v166 = vpack.c.b16 %v153, %v152
    %v167 = vpack.c.b16 %v155, %v154
    %v168 = vpack.c.b16 %v157, %v156
    %v169 = vpack.c.b16 %v159, %v158
    %v170 = vpack.c.b16 %v161, %v160
    %v171 = vpack.c.b16 %v163, %v162
    %v196 = vunpack.c.l.b16 %v112
    %v197 = vunpack.c.l.b16 %v113
    %v198 = vunpack.c.l.b16 %v114
    %v199 = vunpack.c.l.b16 %v115
    %v200 = vunpack.c.l.b16 %v116
    %v201 = vunpack.c.l.b16 %v117
    %v202 = vunpack.c.l.b16 %v118
    %v203 = vunpack.c.l.b16 %v119
    %v204 = vunpack.c.l.b16 %v120
    %v205 = vunpack.c.l.b16 %v121
    %v206 = vunpack.c.l.b16 %v122
    %v207 = vunpack.c.l.b16 %v123
    %v208 = vunpack.c.l.b16 %v124
    %v209 = vunpack.c.l.b16 %v125
    %v210 = vunpack.c.l.b16 %v126
    %v211 = vunpack.c.l.b16 %v127
    %v212 = vpack.c.b16 %v197, %v196
    %v213 = vpack.c.b16 %v199, %v198
    %v214 = vpack.c.b16 %v201, %v200
    %v215 = vpack.c.b16 %v203, %v202
    %v216 = vpack.c.b16 %v205, %v204
    %v217 = vpack.c.b16 %v207, %v206
    %v218 = vpack.c.b16 %v209, %v208
    %v219 = vpack.c.b16 %v211, %v210
    %228 = vmatpush.bf16.msra.mxu0 %v219
    %229 = vmatpush.bf16.msra.mxu0 %v218
    %230 = vmatpush.bf16.msra.mxu0 %v217
    %231 = vmatpush.bf16.msra.mxu0 %v216
    %232 = vmatpush.bf16.msra.mxu0 %v215
    %233 = vmatpush.bf16.msra.mxu0 %v214
    %234 = vmatpush.bf16.msra.mxu0 %v213
    %235 = vmatpush.bf16.msra.mxu0 %v212
    %236 = vmatmul.bf16.gmra.mxu0 %v164
    %v237 = vpop.f32.mrf.mxu0
    %v238 = vadd.f32 %v130, %v237
    %v239 = vpop.f32.mrf.mxu0
    %v240 = vadd.f32 %v130, %v239
    %241 = vmatmul.bf16.gmra.mxu0 %v165
    %v242 = vpop.f32.mrf.mxu0
    %v243 = vadd.f32 %v130, %v242
    %v244 = vpop.f32.mrf.mxu0
    %v245 = vadd.f32 %v130, %v244
    %246 = vmatmul.bf16.gmra.mxu0 %v166
    %v247 = vpop.f32.mrf.mxu0
    %v248 = vadd.f32 %v130, %v247
    %v249 = vpop.f32.mrf.mxu0
    %v250 = vadd.f32 %v130, %v249
    %251 = vmatmul.bf16.gmra.mxu0 %v167
    %v252 = vpop.f32.mrf.mxu0
    %v253 = vadd.f32 %v130, %v252
    %v254 = vpop.f32.mrf.mxu0
    %v255 = vadd.f32 %v130, %v254
    %256 = vmatmul.bf16.gmra.mxu0 %v168
    %v257 = vpop.f32.mrf.mxu0
    %v258 = vadd.f32 %v130, %v257
    %v259 = vpop.f32.mrf.mxu0
    %v260 = vadd.f32 %v130, %v259
    %261 = vmatmul.bf16.gmra.mxu0 %v169
    %v262 = vpop.f32.mrf.mxu0
    %v263 = vadd.f32 %v130, %v262
    %v264 = vpop.f32.mrf.mxu0
    %v265 = vadd.f32 %v130, %v264
    %266 = vmatmul.bf16.gmra.mxu0 %v170
    %v267 = vpop.f32.mrf.mxu0
    %v268 = vadd.f32 %v130, %v267
    %v269 = vpop.f32.mrf.mxu0
    %v270 = vadd.f32 %v130, %v269
    %271 = vmatmul.bf16.gmra.mxu0 %v171
    %v272 = vpop.f32.mrf.mxu0
    %v273 = vadd.f32 %v130, %v272
    %v274 = vpop.f32.mrf.mxu0
    %v275 = vadd.f32 %v130, %v274
    %276 = vdwg.mxu0
    %v277 = vld [vmem:[#allocation2] sm:$0xf]
    %v278 = vld [vmem:[#allocation2 + $0x4] sm:$0xf]
    %v279 = vld [vmem:[#allocation2 + $0x8] sm:$0xf]
    %v280 = vld [vmem:[#allocation2 + $0xc] sm:$0xf]
    %v281 = vld [vmem:[#allocation2 + $0x10] sm:$0xf]
    %v282 = vld [vmem:[#allocation2 + $0x14] sm:$0xf]
    %v283 = vld [vmem:[#allocation2 + $0x18] sm:$0xf]
    %v284 = vld [vmem:[#allocation2 + $0x1c] sm:$0xf]
    %v285 = vld [vmem:[#allocation2 + $0x20] sm:$0xf]
    %v286 = vld [vmem:[#allocation2 + $0x24] sm:$0xf]
    %v287 = vld [vmem:[#allocation2 + $0x28] sm:$0xf]
    %v288 = vld [vmem:[#allocation2 + $0x2c] sm:$0xf]
    %v289 = vld [vmem:[#allocation2 + $0x30] sm:$0xf]
    %v290 = vld [vmem:[#allocation2 + $0x34] sm:$0xf]
    %v291 = vld [vmem:[#allocation2 + $0x38] sm:$0xf]
    %v292 = vld [vmem:[#allocation2 + $0x3c] sm:$0xf]
    %v293 = vld [vmem:[#allocation4] sm:$0xf]
    %v294 = vld [vmem:[#allocation4 + $0x4] sm:$0xf]
    %v295 = vld [vmem:[#allocation4 + $0x8] sm:$0xf]
    %v296 = vld [vmem:[#allocation4 + $0xc] sm:$0xf]
    %v297 = vld [vmem:[#allocation4 + $0x10] sm:$0xf]
    %v298 = vld [vmem:[#allocation4 + $0x14] sm:$0xf]
    %v299 = vld [vmem:[#allocation4 + $0x18] sm:$0xf]
    %v300 = vld [vmem:[#allocation4 + $0x1c] sm:$0xf]
    %v301 = vld [vmem:[#allocation4 + $0x20] sm:$0xf]
    %v302 = vld [vmem:[#allocation4 + $0x24] sm:$0xf]
    %v303 = vld [vmem:[#allocation4 + $0x28] sm:$0xf]
    %v304 = vld [vmem:[#allocation4 + $0x2c] sm:$0xf]
    %v305 = vld [vmem:[#allocation4 + $0x30] sm:$0xf]
    %v306 = vld [vmem:[#allocation4 + $0x34] sm:$0xf]
    %v307 = vld [vmem:[#allocation4 + $0x38] sm:$0xf]
    %v308 = vld [vmem:[#allocation4 + $0x3c] sm:$0xf]
    %v309 = vld [vmem:[#allocation6] sm:$0xf]
    %v310 = vld [vmem:[#allocation6 + $0x4] sm:$0xf]
    %v311 = vld [vmem:[#allocation6 + $0x8] sm:$0xf]
    %v312 = vld [vmem:[#allocation6 + $0xc] sm:$0xf]
    %v313 = vld [vmem:[#allocation6 + $0x10] sm:$0xf]
    %v314 = vld [vmem:[#allocation6 + $0x14] sm:$0xf]
    %v315 = vld [vmem:[#allocation6 + $0x18] sm:$0xf]
    %v316 = vld [vmem:[#allocation6 + $0x1c] sm:$0xf]
    %v317 = vld [vmem:[#allocation6 + $0x20] sm:$0xf]
    %v318 = vld [vmem:[#allocation6 + $0x24] sm:$0xf]
    %v319 = vld [vmem:[#allocation6 + $0x28] sm:$0xf]
    %v320 = vld [vmem:[#allocation6 + $0x2c] sm:$0xf]
    %v321 = vld [vmem:[#allocation6 + $0x30] sm:$0xf]
    %v322 = vld [vmem:[#allocation6 + $0x34] sm:$0xf]
    %v323 = vld [vmem:[#allocation6 + $0x38] sm:$0xf]
    %v324 = vld [vmem:[#allocation6 + $0x3c] sm:$0xf]
    %v325 = vld [vmem:[%s5] sm:$0x1]
    %v327 = vperm.slane %v325, 0
    %v345 = vunpack.c.l.b16 %v277
    %v346 = vunpack.c.l.b16 %v278
    %v347 = vunpack.c.l.b16 %v279
    %v348 = vunpack.c.l.b16 %v280
    %v349 = vunpack.c.l.b16 %v281
    %v350 = vunpack.c.l.b16 %v282
    %v351 = vunpack.c.l.b16 %v283
    %v352 = vunpack.c.l.b16 %v284
    %v353 = vunpack.c.l.b16 %v285
    %v354 = vunpack.c.l.b16 %v286
    %v355 = vunpack.c.l.b16 %v287
    %v356 = vunpack.c.l.b16 %v288
    %v357 = vunpack.c.l.b16 %v289
    %v358 = vunpack.c.l.b16 %v290
    %v359 = vunpack.c.l.b16 %v291
    %v360 = vunpack.c.l.b16 %v292
    %v361 = vpack.c.b16 %v346, %v345
    %v362 = vpack.c.b16 %v348, %v347
    %v363 = vpack.c.b16 %v350, %v349
    %v364 = vpack.c.b16 %v352, %v351
    %v365 = vpack.c.b16 %v354, %v353
    %v366 = vpack.c.b16 %v356, %v355
    %v367 = vpack.c.b16 %v358, %v357
    %v368 = vpack.c.b16 %v360, %v359
    %377 = vmatpush.bf16.msra.mxu0 %v368
    %378 = vmatpush.bf16.msra.mxu0 %v367
    %379 = vmatpush.bf16.msra.mxu0 %v366
    %380 = vmatpush.bf16.msra.mxu0 %v365
    %381 = vmatpush.bf16.msra.mxu0 %v364
    %382 = vmatpush.bf16.msra.mxu0 %v363
    %383 = vmatpush.bf16.msra.mxu0 %v362
    %384 = vmatpush.bf16.msra.mxu0 %v361
    %385 = vmatmul.bf16.gmra.mxu0 0
    %v386 = vpop.f32.mrf.mxu0
    %v387 = vadd.f32 0.0, %v386
    %v388 = vpop.f32.mrf.mxu0
    %v389 = vadd.f32 0.0, %v388
    %390 = vdwg.mxu0
    %v391 = vadd.f32 %v238, %v387
    %v392 = vadd.f32 %v240, %v389
    %v393 = vtanh.pop %v391
    %v394 = vtanh.pop %v392
    %v395 = vpack.c.bf16 %v394, %v393
    %v412 = vunpack.c.l.b16 %v293
    %v413 = vunpack.c.l.b16 %v294
    %v414 = vunpack.c.l.b16 %v295
    %v415 = vunpack.c.l.b16 %v296
    %v416 = vunpack.c.l.b16 %v297
    %v417 = vunpack.c.l.b16 %v298
    %v418 = vunpack.c.l.b16 %v299
    %v419 = vunpack.c.l.b16 %v300
    %v420 = vunpack.c.l.b16 %v301
    %v421 = vunpack.c.l.b16 %v302
    %v422 = vunpack.c.l.b16 %v303
    %v423 = vunpack.c.l.b16 %v304
    %v424 = vunpack.c.l.b16 %v305
    %v425 = vunpack.c.l.b16 %v306
    %v426 = vunpack.c.l.b16 %v307
    %v427 = vunpack.c.l.b16 %v308
    %v428 = vpack.c.b16 %v413, %v412
    %v429 = vpack.c.b16 %v415, %v414
    %v430 = vpack.c.b16 %v417, %v416
    %v431 = vpack.c.b16 %v419, %v418
    %v432 = vpack.c.b16 %v421, %v420
    %v433 = vpack.c.b16 %v423, %v422
    %v434 = vpack.c.b16 %v425, %v424
    %v435 = vpack.c.b16 %v427, %v426
    %444 = vmatpush.bf16.msra.mxu0 %v435
    %445 = vmatpush.bf16.msra.mxu0 %v434
    %446 = vmatpush.bf16.msra.mxu0 %v433
    %447 = vmatpush.bf16.msra.mxu0 %v432
    %448 = vmatpush.bf16.msra.mxu0 %v431
    %449 = vmatpush.bf16.msra.mxu0 %v430
    %450 = vmatpush.bf16.msra.mxu0 %v429
    %451 = vmatpush.bf16.msra.mxu0 %v428
    %452 = vmatmul.bf16.gmra.mxu0 %v395
    %v453 = vpop.f32.mrf.mxu0
    %v454 = vadd.f32 %v327, %v453
    %v455 = vpop.f32.mrf.mxu0
    %v456 = vadd.f32 %v327, %v455
    %457 = vdwg.mxu0
    %v474 = vunpack.c.l.b16 %v309
    %v475 = vunpack.c.l.b16 %v310
    %v476 = vunpack.c.l.b16 %v311
    %v477 = vunpack.c.l.b16 %v312
    %v478 = vunpack.c.l.b16 %v313
    %v479 = vunpack.c.l.b16 %v314
    %v480 = vunpack.c.l.b16 %v315
    %v481 = vunpack.c.l.b16 %v316
    %v482 = vunpack.c.l.b16 %v317
    %v483 = vunpack.c.l.b16 %v318
    %v484 = vunpack.c.l.b16 %v319
    %v485 = vunpack.c.l.b16 %v320
    %v486 = vunpack.c.l.b16 %v321
    %v487 = vunpack.c.l.b16 %v322
    %v488 = vunpack.c.l.b16 %v323
    %v489 = vunpack.c.l.b16 %v324
    %v490 = vpack.c.b16 %v475, %v474
    %v491 = vpack.c.b16 %v477, %v476
    %v492 = vpack.c.b16 %v479, %v478
    %v493 = vpack.c.b16 %v481, %v480
    %v494 = vpack.c.b16 %v483, %v482
    %v495 = vpack.c.b16 %v485, %v484
    %v496 = vpack.c.b16 %v487, %v486
    %v497 = vpack.c.b16 %v489, %v488
    %506 = vmatpush.bf16.msra.mxu0 %v497
    %507 = vmatpush.bf16.msra.mxu0 %v496
    %508 = vmatpush.bf16.msra.mxu0 %v495
    %509 = vmatpush.bf16.msra.mxu0 %v494
    %510 = vmatpush.bf16.msra.mxu0 %v493
    %511 = vmatpush.bf16.msra.mxu0 %v492
    %512 = vmatpush.bf16.msra.mxu0 %v491
    %513 = vmatpush.bf16.msra.mxu0 %v490
    %514 = vmatmul.bf16.gmra.mxu0 0
    %v515 = vpop.f32.mrf.mxu0
    %v516 = vadd.f32 0.0, %v515
    %v517 = vpop.f32.mrf.mxu0
    %v518 = vadd.f32 0.0, %v517
    %519 = vdwg.mxu0
    %v520 = vadd.f32 %v454, %v516
    %v521 = vadd.f32 %v456, %v518
    %v522 = vtanh.pop %v520
    %v523 = vtanh.pop %v521
    %524 = vmatpush.bf16.msra.mxu0 %v368
    %525 = vmatpush.bf16.msra.mxu0 %v367
    %526 = vmatpush.bf16.msra.mxu0 %v366
    %527 = vmatpush.bf16.msra.mxu0 %v365
    %528 = vmatpush.bf16.msra.mxu0 %v364
    %529 = vmatpush.bf16.msra.mxu0 %v363
    %530 = vmatpush.bf16.msra.mxu0 %v362
    %531 = vmatpush.bf16.msra.mxu0 %v361
    %532 = vmatmul.bf16.gmra.mxu0 %v395
    %v533 = vpop.f32.mrf.mxu0
    %v534 = vadd.f32 0.0, %v533
    %v535 = vpop.f32.mrf.mxu0
    %v536 = vadd.f32 0.0, %v535
    %537 = vdwg.mxu0
    %v538 = vadd.f32 %v243, %v534
    %v539 = vadd.f32 %v245, %v536
    %v540 = vtanh.pop %v538
    %v541 = vtanh.pop %v539
    %v542 = vpack.c.bf16 %v541, %v540
    %543 = vmatpush.bf16.msra.mxu0 %v435
    %544 = vmatpush.bf16.msra.mxu0 %v434
    %545 = vmatpush.bf16.msra.mxu0 %v433
    %546 = vmatpush.bf16.msra.mxu0 %v432
    %547 = vmatpush.bf16.msra.mxu0 %v431
    %548 = vmatpush.bf16.msra.mxu0 %v430
    %549 = vmatpush.bf16.msra.mxu0 %v429
    %550 = vmatpush.bf16.msra.mxu0 %v428
    %551 = vmatmul.bf16.gmra.mxu0 %v542
    %v552 = vpop.f32.mrf.mxu0
    %v553 = vadd.f32 %v327, %v552
    %v554 = vpop.f32.mrf.mxu0
    %v555 = vadd.f32 %v327, %v554
    %556 = vdwg.mxu0
    %v557 = vpack.c.bf16 %v523, %v522
    %558 = vmatpush.bf16.msra.mxu0 %v497
    %559 = vmatpush.bf16.msra.mxu0 %v496
    %560 = vmatpush.bf16.msra.mxu0 %v495
    %561 = vmatpush.bf16.msra.mxu0 %v494
    %562 = vmatpush.bf16.msra.mxu0 %v493
    %563 = vmatpush.bf16.msra.mxu0 %v492
    %564 = vmatpush.bf16.msra.mxu0 %v491
    %565 = vmatpush.bf16.msra.mxu0 %v490
    %566 = vmatmul.bf16.gmra.mxu0 %v557
    %v567 = vpop.f32.mrf.mxu0
    %v568 = vadd.f32 0.0, %v567
    %v569 = vpop.f32.mrf.mxu0
    %v570 = vadd.f32 0.0, %v569
    %571 = vdwg.mxu0
    %v572 = vadd.f32 %v553, %v568
    %v573 = vadd.f32 %v555, %v570
    %v574 = vtanh.pop %v572
    %v575 = vtanh.pop %v573
    %576 = vmatpush.bf16.msra.mxu0 %v368
    %577 = vmatpush.bf16.msra.mxu0 %v367
    %578 = vmatpush.bf16.msra.mxu0 %v366
    %579 = vmatpush.bf16.msra.mxu0 %v365
    %580 = vmatpush.bf16.msra.mxu0 %v364
    %581 = vmatpush.bf16.msra.mxu0 %v363
    %582 = vmatpush.bf16.msra.mxu0 %v362
    %583 = vmatpush.bf16.msra.mxu0 %v361
    %584 = vmatmul.bf16.gmra.mxu0 %v542
    %v585 = vpop.f32.mrf.mxu0
    %v586 = vadd.f32 0.0, %v585
    %v587 = vpop.f32.mrf.mxu0
    %v588 = vadd.f32 0.0, %v587
    %589 = vdwg.mxu0
    %v590 = vadd.f32 %v248, %v586
    %v591 = vadd.f32 %v250, %v588
    %v592 = vtanh.pop %v590
    %v593 = vtanh.pop %v591
    %v594 = vpack.c.bf16 %v593, %v592
    %595 = vmatpush.bf16.msra.mxu0 %v435
    %596 = vmatpush.bf16.msra.mxu0 %v434
    %597 = vmatpush.bf16.msra.mxu0 %v433
    %598 = vmatpush.bf16.msra.mxu0 %v432
    %599 = vmatpush.bf16.msra.mxu0 %v431
    %600 = vmatpush.bf16.msra.mxu0 %v430
    %601 = vmatpush.bf16.msra.mxu0 %v429
    %602 = vmatpush.bf16.msra.mxu0 %v428
    %603 = vmatmul.bf16.gmra.mxu0 %v594
    %v604 = vpop.f32.mrf.mxu0
    %v605 = vadd.f32 %v327, %v604
    %v606 = vpop.f32.mrf.mxu0
    %v607 = vadd.f32 %v327, %v606
    %608 = vdwg.mxu0
    %v609 = vpack.c.bf16 %v575, %v574
    %610 = vmatpush.bf16.msra.mxu0 %v497
    %611 = vmatpush.bf16.msra.mxu0 %v496
    %612 = vmatpush.bf16.msra.mxu0 %v495
    %613 = vmatpush.bf16.msra.mxu0 %v494
    %614 = vmatpush.bf16.msra.mxu0 %v493
    %615 = vmatpush.bf16.msra.mxu0 %v492
    %616 = vmatpush.bf16.msra.mxu0 %v491
    %617 = vmatpush.bf16.msra.mxu0 %v490
    %618 = vmatmul.bf16.gmra.mxu0 %v609
    %v619 = vpop.f32.mrf.mxu0
    %v620 = vadd.f32 0.0, %v619
    %v621 = vpop.f32.mrf.mxu0
    %v622 = vadd.f32 0.0, %v621
    %623 = vdwg.mxu0
    %v624 = vadd.f32 %v605, %v620
    %v625 = vadd.f32 %v607, %v622
    %v626 = vtanh.pop %v624
    %v627 = vtanh.pop %v625
    %628 = vmatpush.bf16.msra.mxu0 %v368
    %629 = vmatpush.bf16.msra.mxu0 %v367
    %630 = vmatpush.bf16.msra.mxu0 %v366
    %631 = vmatpush.bf16.msra.mxu0 %v365
    %632 = vmatpush.bf16.msra.mxu0 %v364
    %633 = vmatpush.bf16.msra.mxu0 %v363
    %634 = vmatpush.bf16.msra.mxu0 %v362
    %635 = vmatpush.bf16.msra.mxu0 %v361
    %636 = vmatmul.bf16.gmra.mxu0 %v594
    %v637 = vpop.f32.mrf.mxu0
    %v638 = vadd.f32 0.0, %v637
    %v639 = vpop.f32.mrf.mxu0
    %v640 = vadd.f32 0.0, %v639
    %641 = vdwg.mxu0
    %v642 = vadd.f32 %v253, %v638
    %v643 = vadd.f32 %v255, %v640
    %v644 = vtanh.pop %v642
    %v645 = vtanh.pop %v643
    %v646 = vpack.c.bf16 %v645, %v644
    %647 = vmatpush.bf16.msra.mxu0 %v435
    %648 = vmatpush.bf16.msra.mxu0 %v434
    %649 = vmatpush.bf16.msra.mxu0 %v433
    %650 = vmatpush.bf16.msra.mxu0 %v432
    %651 = vmatpush.bf16.msra.mxu0 %v431
    %652 = vmatpush.bf16.msra.mxu0 %v430
    %653 = vmatpush.bf16.msra.mxu0 %v429
    %654 = vmatpush.bf16.msra.mxu0 %v428
    %655 = vmatmul.bf16.gmra.mxu0 %v646
    %v656 = vpop.f32.mrf.mxu0
    %v657 = vadd.f32 %v327, %v656
    %v658 = vpop.f32.mrf.mxu0
    %v659 = vadd.f32 %v327, %v658
    %660 = vdwg.mxu0
    %v661 = vpack.c.bf16 %v627, %v626
    %662 = vmatpush.bf16.msra.mxu0 %v497
    %663 = vmatpush.bf16.msra.mxu0 %v496
    %664 = vmatpush.bf16.msra.mxu0 %v495
    %665 = vmatpush.bf16.msra.mxu0 %v494
    %666 = vmatpush.bf16.msra.mxu0 %v493
    %667 = vmatpush.bf16.msra.mxu0 %v492
    %668 = vmatpush.bf16.msra.mxu0 %v491
    %669 = vmatpush.bf16.msra.mxu0 %v490
    %670 = vmatmul.bf16.gmra.mxu0 %v661
    %v671 = vpop.f32.mrf.mxu0
    %v672 = vadd.f32 0.0, %v671
    %v673 = vpop.f32.mrf.mxu0
    %v674 = vadd.f32 0.0, %v673
    %675 = vdwg.mxu0
    %v676 = vadd.f32 %v657, %v672
    %v677 = vadd.f32 %v659, %v674
    %v678 = vtanh.pop %v676
    %v679 = vtanh.pop %v677
    %680 = vmatpush.bf16.msra.mxu0 %v368
    %681 = vmatpush.bf16.msra.mxu0 %v367
    %682 = vmatpush.bf16.msra.mxu0 %v366
    %683 = vmatpush.bf16.msra.mxu0 %v365
    %684 = vmatpush.bf16.msra.mxu0 %v364
    %685 = vmatpush.bf16.msra.mxu0 %v363
    %686 = vmatpush.bf16.msra.mxu0 %v362
    %687 = vmatpush.bf16.msra.mxu0 %v361
    %688 = vmatmul.bf16.gmra.mxu0 %v646
    %v689 = vpop.f32.mrf.mxu0
    %v690 = vadd.f32 0.0, %v689
    %v691 = vpop.f32.mrf.mxu0
    %v692 = vadd.f32 0.0, %v691
    %693 = vdwg.mxu0
    %v694 = vadd.f32 %v258, %v690
    %v695 = vadd.f32 %v260, %v692
    %v696 = vtanh.pop %v694
    %v697 = vtanh.pop %v695
    %v698 = vpack.c.bf16 %v697, %v696
    %699 = vmatpush.bf16.msra.mxu0 %v435
    %700 = vmatpush.bf16.msra.mxu0 %v434
    %701 = vmatpush.bf16.msra.mxu0 %v433
    %702 = vmatpush.bf16.msra.mxu0 %v432
    %703 = vmatpush.bf16.msra.mxu0 %v431
    %704 = vmatpush.bf16.msra.mxu0 %v430
    %705 = vmatpush.bf16.msra.mxu0 %v429
    %706 = vmatpush.bf16.msra.mxu0 %v428
    %707 = vmatmul.bf16.gmra.mxu0 %v698
    %v708 = vpop.f32.mrf.mxu0
    %v709 = vadd.f32 %v327, %v708
    %v710 = vpop.f32.mrf.mxu0
    %v711 = vadd.f32 %v327, %v710
    %712 = vdwg.mxu0
    %v713 = vpack.c.bf16 %v679, %v678
    %714 = vmatpush.bf16.msra.mxu0 %v497
    %715 = vmatpush.bf16.msra.mxu0 %v496
    %716 = vmatpush.bf16.msra.mxu0 %v495
    %717 = vmatpush.bf16.msra.mxu0 %v494
    %718 = vmatpush.bf16.msra.mxu0 %v493
    %719 = vmatpush.bf16.msra.mxu0 %v492
    %720 = vmatpush.bf16.msra.mxu0 %v491
    %721 = vmatpush.bf16.msra.mxu0 %v490
    %722 = vmatmul.bf16.gmra.mxu0 %v713
    %v723 = vpop.f32.mrf.mxu0
    %v724 = vadd.f32 0.0, %v723
    %v725 = vpop.f32.mrf.mxu0
    %v726 = vadd.f32 0.0, %v725
    %727 = vdwg.mxu0
    %v728 = vadd.f32 %v709, %v724
    %v729 = vadd.f32 %v711, %v726
    %v730 = vtanh.pop %v728
    %v731 = vtanh.pop %v729
    %732 = vmatpush.bf16.msra.mxu0 %v368
    %733 = vmatpush.bf16.msra.mxu0 %v367
    %734 = vmatpush.bf16.msra.mxu0 %v366
    %735 = vmatpush.bf16.msra.mxu0 %v365
    %736 = vmatpush.bf16.msra.mxu0 %v364
    %737 = vmatpush.bf16.msra.mxu0 %v363
    %738 = vmatpush.bf16.msra.mxu0 %v362
    %739 = vmatpush.bf16.msra.mxu0 %v361
    %740 = vmatmul.bf16.gmra.mxu0 %v698
    %v741 = vpop.f32.mrf.mxu0
    %v742 = vadd.f32 0.0, %v741
    %v743 = vpop.f32.mrf.mxu0
    %v744 = vadd.f32 0.0, %v743
    %745 = vdwg.mxu0
    %v746 = vadd.f32 %v263, %v742
    %v747 = vadd.f32 %v265, %v744
    %v748 = vtanh.pop %v746
    %v749 = vtanh.pop %v747
    %v750 = vpack.c.bf16 %v749, %v748
    %751 = vmatpush.bf16.msra.mxu0 %v435
    %752 = vmatpush.bf16.msra.mxu0 %v434
    %753 = vmatpush.bf16.msra.mxu0 %v433
    %754 = vmatpush.bf16.msra.mxu0 %v432
    %755 = vmatpush.bf16.msra.mxu0 %v431
    %756 = vmatpush.bf16.msra.mxu0 %v430
    %757 = vmatpush.bf16.msra.mxu0 %v429
    %758 = vmatpush.bf16.msra.mxu0 %v428
    %759 = vmatmul.bf16.gmra.mxu0 %v750
    %v760 = vpop.f32.mrf.mxu0
    %v761 = vadd.f32 %v327, %v760
    %v762 = vpop.f32.mrf.mxu0
    %v763 = vadd.f32 %v327, %v762
    %764 = vdwg.mxu0
    %v765 = vpack.c.bf16 %v731, %v730
    %766 = vmatpush.bf16.msra.mxu0 %v497
    %767 = vmatpush.bf16.msra.mxu0 %v496
    %768 = vmatpush.bf16.msra.mxu0 %v495
    %769 = vmatpush.bf16.msra.mxu0 %v494
    %770 = vmatpush.bf16.msra.mxu0 %v493
    %771 = vmatpush.bf16.msra.mxu0 %v492
    %772 = vmatpush.bf16.msra.mxu0 %v491
    %773 = vmatpush.bf16.msra.mxu0 %v490
    %774 = vmatmul.bf16.gmra.mxu0 %v765
    %v775 = vpop.f32.mrf.mxu0
    %v776 = vadd.f32 0.0, %v775
    %v777 = vpop.f32.mrf.mxu0
    %v778 = vadd.f32 0.0, %v777
    %779 = vdwg.mxu0
    %v780 = vadd.f32 %v761, %v776
    %v781 = vadd.f32 %v763, %v778
    %v782 = vtanh.pop %v780
    %v783 = vtanh.pop %v781
    %784 = vmatpush.bf16.msra.mxu0 %v368
    %785 = vmatpush.bf16.msra.mxu0 %v367
    %786 = vmatpush.bf16.msra.mxu0 %v366
    %787 = vmatpush.bf16.msra.mxu0 %v365
    %788 = vmatpush.bf16.msra.mxu0 %v364
    %789 = vmatpush.bf16.msra.mxu0 %v363
    %790 = vmatpush.bf16.msra.mxu0 %v362
    %791 = vmatpush.bf16.msra.mxu0 %v361
    %792 = vmatmul.bf16.gmra.mxu0 %v750
    %v793 = vpop.f32.mrf.mxu0
    %v794 = vadd.f32 0.0, %v793
    %v795 = vpop.f32.mrf.mxu0
    %v796 = vadd.f32 0.0, %v795
    %797 = vdwg.mxu0
    %v798 = vadd.f32 %v268, %v794
    %v799 = vadd.f32 %v270, %v796
    %v800 = vtanh.pop %v798
    %v801 = vtanh.pop %v799
    %v802 = vpack.c.bf16 %v801, %v800
    %803 = vmatpush.bf16.msra.mxu0 %v435
    %804 = vmatpush.bf16.msra.mxu0 %v434
    %805 = vmatpush.bf16.msra.mxu0 %v433
    %806 = vmatpush.bf16.msra.mxu0 %v432
    %807 = vmatpush.bf16.msra.mxu0 %v431
    %808 = vmatpush.bf16.msra.mxu0 %v430
    %809 = vmatpush.bf16.msra.mxu0 %v429
    %810 = vmatpush.bf16.msra.mxu0 %v428
    %811 = vmatmul.bf16.gmra.mxu0 %v802
    %v812 = vpop.f32.mrf.mxu0
    %v813 = vadd.f32 %v327, %v812
    %v814 = vpop.f32.mrf.mxu0
    %v815 = vadd.f32 %v327, %v814
    %816 = vdwg.mxu0
    %v817 = vpack.c.bf16 %v783, %v782
    %818 = vmatpush.bf16.msra.mxu0 %v497
    %819 = vmatpush.bf16.msra.mxu0 %v496
    %820 = vmatpush.bf16.msra.mxu0 %v495
    %821 = vmatpush.bf16.msra.mxu0 %v494
    %822 = vmatpush.bf16.msra.mxu0 %v493
    %823 = vmatpush.bf16.msra.mxu0 %v492
    %824 = vmatpush.bf16.msra.mxu0 %v491
    %825 = vmatpush.bf16.msra.mxu0 %v490
    %826 = vmatmul.bf16.gmra.mxu0 %v817
    %v827 = vpop.f32.mrf.mxu0
    %v828 = vadd.f32 0.0, %v827
    %v829 = vpop.f32.mrf.mxu0
    %v830 = vadd.f32 0.0, %v829
    %831 = vdwg.mxu0
    %v832 = vadd.f32 %v813, %v828
    %v833 = vadd.f32 %v815, %v830
    %v834 = vtanh.pop %v832
    %v835 = vtanh.pop %v833
    %836 = vmatpush.bf16.msra.mxu0 %v368
    %837 = vmatpush.bf16.msra.mxu0 %v367
    %838 = vmatpush.bf16.msra.mxu0 %v366
    %839 = vmatpush.bf16.msra.mxu0 %v365
    %840 = vmatpush.bf16.msra.mxu0 %v364
    %841 = vmatpush.bf16.msra.mxu0 %v363
    %842 = vmatpush.bf16.msra.mxu0 %v362
    %843 = vmatpush.bf16.msra.mxu0 %v361
    %844 = vmatmul.bf16.gmra.mxu0 %v802
    %v845 = vpop.f32.mrf.mxu0
    %v846 = vadd.f32 0.0, %v845
    %v847 = vpop.f32.mrf.mxu0
    %v848 = vadd.f32 0.0, %v847
    %849 = vdwg.mxu0
    %v850 = vadd.f32 %v273, %v846
    %v851 = vadd.f32 %v275, %v848
    %v852 = vtanh.pop %v850
    %v853 = vtanh.pop %v851
    %v854 = vpack.c.bf16 %v853, %v852
    %855 = vmatpush.bf16.msra.mxu0 %v435
    %856 = vmatpush.bf16.msra.mxu0 %v434
    %857 = vmatpush.bf16.msra.mxu0 %v433
    %858 = vmatpush.bf16.msra.mxu0 %v432
    %859 = vmatpush.bf16.msra.mxu0 %v431
    %860 = vmatpush.bf16.msra.mxu0 %v430
    %861 = vmatpush.bf16.msra.mxu0 %v429
    %862 = vmatpush.bf16.msra.mxu0 %v428
    %863 = vmatmul.bf16.gmra.mxu0 %v854
    %v864 = vpop.f32.mrf.mxu0
    %v865 = vadd.f32 %v327, %v864
    %v866 = vpop.f32.mrf.mxu0
    %v867 = vadd.f32 %v327, %v866
    %868 = vdwg.mxu0
    %v869 = vpack.c.bf16 %v835, %v834
    %870 = vmatpush.bf16.msra.mxu0 %v497
    %871 = vmatpush.bf16.msra.mxu0 %v496
    %872 = vmatpush.bf16.msra.mxu0 %v495
    %873 = vmatpush.bf16.msra.mxu0 %v494
    %874 = vmatpush.bf16.msra.mxu0 %v493
    %875 = vmatpush.bf16.msra.mxu0 %v492
    %876 = vmatpush.bf16.msra.mxu0 %v491
    %877 = vmatpush.bf16.msra.mxu0 %v490
    %878 = vmatmul.bf16.gmra.mxu0 %v869
    %v879 = vpop.f32.mrf.mxu0
    %v880 = vadd.f32 0.0, %v879
    %v881 = vpop.f32.mrf.mxu0
    %v882 = vadd.f32 0.0, %v881
    %883 = vdwg.mxu0
    %v884 = vadd.f32 %v865, %v880
    %v885 = vadd.f32 %v867, %v882
    %v886 = vtanh.pop %v884
    %v887 = vtanh.pop %v885
    %v888 = vpack.c.bf16 %v887, %v886
    %v889 = vld [vmem:[#allocation7] sm:$0xf]
    %v890 = vld [vmem:[#allocation7 + $0x4] sm:$0xf]
    %v891 = vld [vmem:[#allocation7 + $0x8] sm:$0xf]
    %v892 = vld [vmem:[#allocation7 + $0xc] sm:$0xf]
    %v893 = vld [vmem:[#allocation7 + $0x10] sm:$0xf]
    %v894 = vld [vmem:[#allocation7 + $0x14] sm:$0xf]
    %v895 = vld [vmem:[#allocation7 + $0x18] sm:$0xf]
    %v896 = vld [vmem:[#allocation7 + $0x1c] sm:$0xf]
    %v897 = vld [vmem:[#allocation7 + $0x20] sm:$0xf]
    %v898 = vld [vmem:[#allocation7 + $0x24] sm:$0xf]
    %v899 = vld [vmem:[#allocation7 + $0x28] sm:$0xf]
    %v900 = vld [vmem:[#allocation7 + $0x2c] sm:$0xf]
    %v901 = vld [vmem:[#allocation7 + $0x30] sm:$0xf]
    %v902 = vld [vmem:[#allocation7 + $0x34] sm:$0xf]
    %v903 = vld [vmem:[#allocation7 + $0x38] sm:$0xf]
    %v904 = vld [vmem:[#allocation7 + $0x3c] sm:$0xf]
    %v905 = vld [vmem:[%s8] sm:$0x1]
    %v907 = vperm.slane %v905, 0
    %v925 = vunpack.c.l.b16 %v889
    %v926 = vunpack.c.l.b16 %v890
    %v927 = vunpack.c.l.b16 %v891
    %v928 = vunpack.c.l.b16 %v892
    %v929 = vunpack.c.l.b16 %v893
    %v930 = vunpack.c.l.b16 %v894
    %v931 = vunpack.c.l.b16 %v895
    %v932 = vunpack.c.l.b16 %v896
    %v933 = vunpack.c.l.b16 %v897
    %v934 = vunpack.c.l.b16 %v898
    %v935 = vunpack.c.l.b16 %v899
    %v936 = vunpack.c.l.b16 %v900
    %v937 = vunpack.c.l.b16 %v901
    %v938 = vunpack.c.l.b16 %v902
    %v939 = vunpack.c.l.b16 %v903
    %v940 = vunpack.c.l.b16 %v904
    %v941 = vpack.c.b16 %v926, %v925
    %v942 = vpack.c.b16 %v928, %v927
    %v943 = vpack.c.b16 %v930, %v929
    %v944 = vpack.c.b16 %v932, %v931
    %v945 = vpack.c.b16 %v934, %v933
    %v946 = vpack.c.b16 %v936, %v935
    %v947 = vpack.c.b16 %v938, %v937
    %v948 = vpack.c.b16 %v940, %v939
    %957 = vmatpush.bf16.msra.mxu0 %v948
    %958 = vmatpush.bf16.msra.mxu0 %v947
    %959 = vmatpush.bf16.msra.mxu0 %v946
    %960 = vmatpush.bf16.msra.mxu0 %v945
    %961 = vmatpush.bf16.msra.mxu0 %v944
    %962 = vmatpush.bf16.msra.mxu0 %v943
    %963 = vmatpush.bf16.msra.mxu0 %v942
    %964 = vmatpush.bf16.msra.mxu0 %v941
    %965 = vmatmul.bf16.gmra.mxu0 %v888
    %v966 = vpop.f32.mrf.mxu0
    %v967 = vadd.f32 %v907, %v966
    %v968 = vpop.f32.mrf.mxu0
    %v969 = vadd.f32 %v907, %v968
    %970 = vdwg.mxu0
    %971 = vst [vmem:[%s9] sm:$0xff] %v967
    %972 = vst [vmem:[%s9 + $0x8] sm:$0xff] %v969
    // Predicated region
    $region54: #{_lambda_.1} parent=1 // pred_check
      _
    $region55: #{_lambda_.1} parent=1 // pred_check_branch
      %974 = sbr.rel (0) target = $region57
    $region56: #{_lambda_.1} parent=1 // pred_region
      _
    $region57: #{_lambda_.1} parent=1 // pred_fallthru
      _
    // Predicated region
    $region58: #{_lambda_.1} parent=1 // pred_check
      _
    $region59: #{_lambda_.1} parent=1 // pred_check_branch
      %976 = sbr.rel (0) target = $region61
    $region60: #{_lambda_.1} parent=1 // pred_region
      _
    $region61: #{_lambda_.1} parent=1 // pred_fallthru
      _
    %977 = vsyncpa [#allocation3], 1
    %978 = vsyncpa [#allocation5], 1
    %979 = vsyncpa [#allocation8], 1

</llo_original>
